<compile_context>
chip_gen: v6e
topology: v6e:2x2x1
jax: 0.10.0
libtpu: 0.0.40
codegen_flags: <defaults>
</compile_context>

<pallas_src>
import jax
import jax.numpy as jnp
from jax.experimental import pallas as pl
from jax.experimental.pallas import tpu as pltpu

_MAX_TILE_D = 2048                      # lane dim cap (multiple of 128)
_DEFAULT_BLOCK_BYTES = 2 * 1024 * 1024  # conservative (v7x-safe) per-array block
_DEFAULT_VMEM_LIMIT = 48 * 1024 * 1024


def _device_budget():
    """Pick per-array block bytes + scoped VMEM limit for this TPU generation."""
    block_bytes = _DEFAULT_BLOCK_BYTES
    vmem_limit = _DEFAULT_VMEM_LIMIT
    try:
        cap = pltpu.get_tpu_info().vmem_capacity_bytes
        if cap >= 100 * 1024 * 1024:      # v5e / v6e: 128 MiB physical VMEM
            block_bytes = 4 * 1024 * 1024
            vmem_limit = 96 * 1024 * 1024
        else:                             # v7x: 64 MiB physical VMEM
            block_bytes = 2 * 1024 * 1024
            vmem_limit = 52 * 1024 * 1024
    except Exception:
        pass                              # interpret mode / unknown hw: stay safe
    return block_bytes, vmem_limit


def _choose_tiles(B, D, target_bytes):
    """Blocks obey the (8, 128) rule (or full extent) and hit ~target_bytes."""
    itemsize = 4  # in-kernel math is f32
    td = D if D <= _MAX_TILE_D else _MAX_TILE_D          # mult of 128 or full D
    tb_budget = max(8, (target_bytes // (itemsize * td)) // 8 * 8)
    tb = B if B <= tb_budget else tb_budget              # mult of 8 or full B
    return tb, td


def _interp_body(t_ref, g_ref, x0_ref, x1_ref, z_ref):
    t = t_ref[...].astype(jnp.float32)       # (tb, 1) broadcasts over (tb, td)
    g = g_ref[...].astype(jnp.float32)       # gamma(t), precomputed per row
    x0 = x0_ref[...].astype(jnp.float32)
    x1 = x1_ref[...].astype(jnp.float32)
    z = z_ref[...].astype(jnp.float32)
    it = (1.0 - t) * x0 + t * x1             # It(t, x0, x1)
    gz = g * z                                # gamma(t) * z
    return it, gz


def _antithetic_kernel(t_ref, g_ref, x0_ref, x1_ref, z_ref, xp_ref, xm_ref):
    it, gz = _interp_body(t_ref, g_ref, x0_ref, x1_ref, z_ref)
    xp_ref[...] = (it + gz).astype(xp_ref.dtype)
    xm_ref[...] = (it - gz).astype(xm_ref.dtype)


def _regular_kernel(t_ref, g_ref, x0_ref, x1_ref, z_ref, xt_ref):
    it, gz = _interp_body(t_ref, g_ref, x0_ref, x1_ref, z_ref)
    xt_ref[...] = (it + gz).astype(xt_ref.dtype)


def _build_call(kernel, n_out, B, D, out_dtype, block_bytes, vmem_limit):
    tb, td = _choose_tiles(B, D, block_bytes)
    gb, gd = pl.cdiv(B, tb), pl.cdiv(D, td)

    # Put the axis with more blocks first so the megacore-sharded ("parallel")
    # leading grid axis has work for both TensorCores on v7x.
    if gd > gb:
        grid = (gd, gb)
        t_spec = pl.BlockSpec((tb, 1), lambda d, b: (b, 0))
        x_spec = pl.BlockSpec((tb, td), lambda d, b: (b, d))
    else:
        grid = (gb, gd)
        t_spec = pl.BlockSpec((tb, 1), lambda b, d: (b, 0))
        x_spec = pl.BlockSpec((tb, td), lambda b, d: (b, d))

    if n_out == 1:
        out_shape = jax.ShapeDtypeStruct((B, D), out_dtype)
        out_specs = x_spec
    else:
        out_shape = tuple(jax.ShapeDtypeStruct((B, D), out_dtype) for _ in range(n_out))
        out_specs = [x_spec] * n_out

    return pl.pallas_call(
        kernel,
        out_shape=out_shape,
        grid=grid,
        in_specs=[t_spec, t_spec, x_spec, x_spec, x_spec],
        out_specs=out_specs,
        compiler_params=pltpu.CompilerParams(
            dimension_semantics=("parallel", "parallel"),
            vmem_limit_bytes=vmem_limit,
        ),
    )


def _prep(key, t, x0, x1):
    B, D = x0.shape
    assert x1.shape == (B, D) and t.shape == (B, 1)
    z = jax.random.normal(key, (B, D), dtype=jnp.float32)
    t32 = t.astype(jnp.float32)
    # Clamp the sqrt argument so t slightly outside [0, 1] cannot produce NaN.
    gamma = jnp.sqrt(jnp.maximum(2.0 * t32 * (1.0 - t32), 0.0))
    return z, t32, gamma


def calc_antithetic_xts(key, t, x0, x1, *, out_dtype=None, target_block_bytes=None):
    """Pallas equivalent of BaseInterpolant.calc_antithetic_xts.

    t: [B, 1], x0/x1: [B, D].  Returns (It + gamma*z, It - gamma*z, z).
    Pass out_dtype=jnp.bfloat16 to cut HBM write traffic ~30% when downstream
    tolerates bf16 (math stays f32 in-kernel).
    """
    B, D = x0.shape
    out_dtype = x0.dtype if out_dtype is None else out_dtype
    block_bytes, vmem_limit = _device_budget()
    if target_block_bytes is not None:
        block_bytes = target_block_bytes
    z, t32, gamma = _prep(key, t, x0, x1)
    call = _build_call(_antithetic_kernel, 2, B, D, out_dtype, block_bytes, vmem_limit)
    xp, xm = call(t32, gamma, x0, x1, z)
    return xp, xm, z.astype(out_dtype)


def calc_regular_xt(key, t, x0, x1, *, out_dtype=None, target_block_bytes=None):
    """Pallas equivalent of BaseInterpolant.calc_regular_xt (never computes xm)."""
    B, D = x0.shape
    out_dtype = x0.dtype if out_dtype is None else out_dtype
    block_bytes, vmem_limit = _device_budget()
    if target_block_bytes is not None:
        block_bytes = target_block_bytes
    z, t32, gamma = _prep(key, t, x0, x1)
    call = _build_call(_regular_kernel, 1, B, D, out_dtype, block_bytes, vmem_limit)
    xt = call(t32, gamma, x0, x1, z)
    return xt, z.astype(out_dtype)


if __name__ == "__main__":
    # Small deterministic inputs: batch=8, hidden=256 (latent vectors).
    B, D = 8, 256
    key = jax.random.PRNGKey(0)
    k_t, k_x0, k_x1, k_z1, k_z2 = jax.random.split(key, 5)

    t = jax.random.uniform(k_t, (B, 1), dtype=jnp.float32)
    x0 = jax.random.normal(k_x0, (B, D), dtype=jnp.float32)
    x1 = jax.random.normal(k_x1, (B, D), dtype=jnp.float32)

    xp, xm, z = calc_antithetic_xts(k_z1, t, x0, x1)
    xt, z_reg = calc_regular_xt(k_z2, t, x0, x1)
    jax.block_until_ready((xp, xm, z, xt, z_reg))

    # Reference interpolant / gamma in plain JAX.
    it_ref = (1.0 - t) * x0 + t * x1
    g_ref = jnp.sqrt(2.0 * t * (1.0 - t))

    assert jnp.allclose(xp, it_ref + g_ref * z, atol=1e-5)
    assert jnp.allclose(xm, it_ref - g_ref * z, atol=1e-5)
    assert jnp.allclose(0.5 * (xp + xm), it_ref, atol=1e-5)   # midpoint recovers It
    assert jnp.allclose(xt, it_ref + g_ref * z_reg, atol=1e-5)

    # Multi-block grid + ragged batch edge (tiny forced block size).
    B2 = 20
    k_t2, k_x02, k_x12, k_z3 = jax.random.split(jax.random.PRNGKey(1), 4)
    t2 = jax.random.uniform(k_t2, (B2, 1), dtype=jnp.float32)
    x02 = jax.random.normal(k_x02, (B2, D), dtype=jnp.float32)
    x12 = jax.random.normal(k_x12, (B2, D), dtype=jnp.float32)
    xp2, xm2, z2 = calc_antithetic_xts(k_z3, t2, x02, x12, target_block_bytes=8 * 128 * 4)
    jax.block_until_ready((xp2, xm2, z2))
    it2 = (1.0 - t2) * x02 + t2 * x12
    g2 = jnp.sqrt(2.0 * t2 * (1.0 - t2))
    assert jnp.allclose(xp2, it2 + g2 * z2, atol=1e-5)
    assert jnp.allclose(xm2, it2 - g2 * z2, atol=1e-5)

    # bf16 output path: cuts write traffic on this HBM-bound kernel.
    xp_b, xm_b, z_b = calc_antithetic_xts(k_z1, t, x0, x1, out_dtype=jnp.bfloat16)
    jax.block_until_ready((xp_b, xm_b, z_b))
    assert xp_b.dtype == jnp.bfloat16 and xm_b.dtype == jnp.bfloat16
    assert bool(jnp.all(jnp.isfinite(xp_b.astype(jnp.float32))))

    print("KERNEL_OK")
</pallas_src>

<mosaic_0001>
module attributes {stable_mosaic.version = 11 : i64} {
  func.func @_antithetic_kernel(%arg0: i32, %arg1: i32, %arg2: memref<8x1xf32, #tpu.memory_space<vmem>>, %arg3: memref<8x1xf32, #tpu.memory_space<vmem>>, %arg4: memref<8x256xf32, #tpu.memory_space<vmem>>, %arg5: memref<8x256xf32, #tpu.memory_space<vmem>>, %arg6: memref<8x256xf32, #tpu.memory_space<vmem>>, %arg7: memref<8x256xf32, #tpu.memory_space<vmem>>, %arg8: memref<8x256xf32, #tpu.memory_space<vmem>>) attributes {dimension_semantics = [#tpu.dimension_semantics<parallel>, #tpu.dimension_semantics<parallel>], iteration_bounds = array<i64: 1, 1>, scalar_prefetch = 0 : i64, scratch_operands = 0 : i64, tpu.core_type = #tpu.core_type<tc>, window_params = [{transform_indices = @transform_0, window_bounds = array<i64: 8, 1>}, {transform_indices = @transform_1, window_bounds = array<i64: 8, 1>}, {transform_indices = @transform_2, window_bounds = array<i64: 8, 256>}, {transform_indices = @transform_3, window_bounds = array<i64: 8, 256>}, {transform_indices = @transform_4, window_bounds = array<i64: 8, 256>}, {transform_indices = @transform_5, window_bounds = array<i64: 8, 256>}, {transform_indices = @transform_6, window_bounds = array<i64: 8, 256>}]} {
    %c0 = arith.constant 0 : index
    %c0_0 = arith.constant 0 : index
    %0 = vector.load %arg2[%c0, %c0_0] : memref<8x1xf32, #tpu.memory_space<vmem>>, vector<8x1xf32>
    %c0_1 = arith.constant 0 : index
    %c0_2 = arith.constant 0 : index
    %1 = vector.load %arg3[%c0_1, %c0_2] : memref<8x1xf32, #tpu.memory_space<vmem>>, vector<8x1xf32>
    %c0_3 = arith.constant 0 : index
    %c0_4 = arith.constant 0 : index
    %2 = vector.load %arg4[%c0_3, %c0_4] : memref<8x256xf32, #tpu.memory_space<vmem>>, vector<8x256xf32>
    %c0_5 = arith.constant 0 : index
    %c0_6 = arith.constant 0 : index
    %3 = vector.load %arg5[%c0_5, %c0_6] : memref<8x256xf32, #tpu.memory_space<vmem>>, vector<8x256xf32>
    %c0_7 = arith.constant 0 : index
    %c0_8 = arith.constant 0 : index
    %4 = vector.load %arg6[%c0_7, %c0_8] : memref<8x256xf32, #tpu.memory_space<vmem>>, vector<8x256xf32>
    %cst = arith.constant 1.000000e+00 : f32
    %5 = vector.broadcast %cst : f32 to vector<8x1xf32>
    %6 = arith.subf %5, %0 : vector<8x1xf32>
    %7 = vector.broadcast %6 : vector<8x1xf32> to vector<8x256xf32>
    %8 = arith.mulf %7, %2 : vector<8x256xf32>
    %9 = vector.broadcast %0 : vector<8x1xf32> to vector<8x256xf32>
    %10 = arith.mulf %9, %3 : vector<8x256xf32>
    %11 = arith.addf %8, %10 : vector<8x256xf32>
    %12 = vector.broadcast %1 : vector<8x1xf32> to vector<8x256xf32>
    %13 = arith.mulf %12, %4 : vector<8x256xf32>
    %14 = arith.addf %11, %13 : vector<8x256xf32>
    %c0_9 = arith.constant 0 : index
    %c0_10 = arith.constant 0 : index
    %15 = vector.load %arg7[%c0_9, %c0_10] : memref<8x256xf32, #tpu.memory_space<vmem>>, vector<8x256xf32>
    tpu.vector_store %arg7[%c0_9, %c0_10], %14 {strides = array<i32>} : memref<8x256xf32, #tpu.memory_space<vmem>>, vector<8x256xf32>,
    %16 = arith.subf %11, %13 : vector<8x256xf32>
    %c0_11 = arith.constant 0 : index
    %c0_12 = arith.constant 0 : index
    %17 = vector.load %arg8[%c0_11, %c0_12] : memref<8x256xf32, #tpu.memory_space<vmem>>, vector<8x256xf32>
    tpu.vector_store %arg8[%c0_11, %c0_12], %16 {strides = array<i32>} : memref<8x256xf32, #tpu.memory_space<vmem>>, vector<8x256xf32>,
    return
  }
  func.func @transform_0(%arg0: i32, %arg1: i32) -> (i32, i32) {
    %c0_i32 = arith.constant 0 : i32
    %c0_i32_0 = arith.constant 0 : i32
    return %arg0, %c0_i32 : i32, i32
  }
  func.func @transform_1(%arg0: i32, %arg1: i32) -> (i32, i32) {
    %c0_i32 = arith.constant 0 : i32
    %c0_i32_0 = arith.constant 0 : i32
    return %arg0, %c0_i32 : i32, i32
  }
  func.func @transform_2(%arg0: i32, %arg1: i32) -> (i32, i32) {
    %c0_i32 = arith.constant 0 : i32
    return %arg0, %arg1 : i32, i32
  }
  func.func @transform_3(%arg0: i32, %arg1: i32) -> (i32, i32) {
    %c0_i32 = arith.constant 0 : i32
    return %arg0, %arg1 : i32, i32
  }
  func.func @transform_4(%arg0: i32, %arg1: i32) -> (i32, i32) {
    %c0_i32 = arith.constant 0 : i32
    return %arg0, %arg1 : i32, i32
  }
  func.func @transform_5(%arg0: i32, %arg1: i32) -> (i32, i32) {
    %c0_i32 = arith.constant 0 : i32
    return %arg0, %arg1 : i32, i32
  }
  func.func @transform_6(%arg0: i32, %arg1: i32) -> (i32, i32) {
    %c0_i32 = arith.constant 0 : i32
    return %arg0, %arg1 : i32, i32
  }
}

</mosaic_0001>

<llo_original>
// kernel: tpu_custom_call.1
$region0: #{tpu_custom_call.1}
  #allocation0 [shape = 'u32[]', space=smem, size = 0x4, offset = 0x4, fixed_abs, tag = 'smem constant byte address 0x4 - core index']
  #allocation1 [shape = 'u32[144,128]{1,0:T(1,128)}', space=vmem, size = 0x12000, scoped, tag = 'internal scratch']
  %s0 = inlined_call_operand.vmem [shape: f32[8,1], index: 0, kind: input, shape index: {}]
  %s1 = inlined_call_operand.vmem [shape: f32[8,1], index: 1, kind: input, shape index: {}]
  %s2 = inlined_call_operand.vmem [shape: f32[8,256], index: 2, kind: input, shape index: {}]
  %s3 = inlined_call_operand.hbm [shape: f32[8,256], index: 3, kind: input, shape index: {}]
  %s4 = inlined_call_operand.hbm [shape: f32[8,256], index: 4, kind: input, shape index: {}]
  %s5 = inlined_call_operand.hbm [shape: f32[8,256], index: 5, kind: output, shape index: {0}]
  %s6 = inlined_call_operand.hbm [shape: f32[8,256], index: 6, kind: output, shape index: {1}]
  %7 = xla_tuple %s5, %s6
  %s8 = sld [smem:[#allocation0]]
  $region46: #{tpu_custom_call.1} parent=0
    _
  %s10 = ssub.s32 1, %s8
  %s11 = scalar_select 0, %s10, %s8
  $region1: #{tpu_custom_call.1} parent=0
    #allocation2 [shape = 'u8[8192]{0}', space=vmem, size = 0x2000, scoped, tag = 'input window, operand 3, single buffered']
    #allocation3 [shape = 's32[1]{0}', space=sflag, size = 0x4, scoped, tag = 'scoped memory for tpu_custom_call.1']
    #allocation4 [shape = 's32[1]{0}', space=sflag, size = 0x4, scoped, tag = 'scoped memory for tpu_custom_call.1']
    #allocation5 [shape = 'u8[8192]{0}', space=vmem, size = 0x2000, scoped, tag = 'input window, operand 4, single buffered']
    #allocation6 [shape = 's32[1]{0}', space=sflag, size = 0x4, scoped, tag = 'scoped memory for tpu_custom_call.1']
    #allocation7 [shape = 'u8[8192]{0}', space=vmem, size = 0x2000, scoped, tag = 'output window, operand 0, single buffered']
    #allocation8 [shape = 'u8[8192]{0}', space=vmem, size = 0x2000, scoped, tag = 'output window, operand 1, single buffered']
    #allocation9 [shape = 's32[1]{0}', space=sflag, size = 0x4, scoped, tag = 'scoped memory for tpu_custom_call.1']
    %12 = vsyncpa [#allocation3], 0
    %13 = vsyncpa [#allocation6], 0
    %14 = vsyncpa [#allocation4], 0
    %15 = vsyncpa [#allocation9], 0
    // Predicated region
    $region2: #{tpu_custom_call.1} parent=1 // pred_check
      _
    $region3: #{tpu_custom_call.1} parent=1 // pred_check_branch
      %17 = sbr.rel (0) target = $region5
    $region4: #{tpu_custom_call.1} parent=1 // pred_region
      _
    $region5: #{tpu_custom_call.1} parent=1 // pred_fallthru
      _
    // Predicated region
    $region6: #{tpu_custom_call.1} parent=1 // pred_check
      _
    $region7: #{tpu_custom_call.1} parent=1 // pred_check_branch
      %19 = sbr.rel (0) target = $region9
    $region8: #{tpu_custom_call.1} parent=1 // pred_region
      _
    $region9: #{tpu_custom_call.1} parent=1 // pred_fallthru
      _
    // Predicated region
    $region10: #{tpu_custom_call.1} parent=1 // pred_check
      _
    $region11: #{tpu_custom_call.1} parent=1 // pred_check_branch
      %21 = sbr.rel (0) target = $region13
    $region12: #{tpu_custom_call.1} parent=1 // pred_region
      _
    $region13: #{tpu_custom_call.1} parent=1 // pred_fallthru
      _
    // Predicated region
    $region14: #{tpu_custom_call.1} parent=1 // pred_check
      _
    $region15: #{tpu_custom_call.1} parent=1 // pred_check_branch
      %23 = sbr.rel (0) target = $region17
    $region16: #{tpu_custom_call.1} parent=1 // pred_region
      %s25 = ssub.s32 256, 256
      %26 = vsyncadd [#allocation3], %s25
      %s28 = sshll.u32 [#allocation2], 4
      %s29 = int_to_ptr.vmem [resolvable:$true] %s28
      %31 = dma.hbm_to_vmem [thread:$0]  %s3, 256, %s29, [#allocation3]
    $region17: #{tpu_custom_call.1} parent=1 // pred_fallthru
      _
    // Predicated region
    $region18: #{tpu_custom_call.1} parent=1 // pred_check
      _
    $region19: #{tpu_custom_call.1} parent=1 // pred_check_branch
      %33 = sbr.rel (0) target = $region21
    $region20: #{tpu_custom_call.1} parent=1 // pred_region
      %s35 = ssub.s32 256, 256
      %36 = vsyncadd [#allocation6], %s35
      %s38 = sshll.u32 [#allocation5], 4
      %s39 = int_to_ptr.vmem [resolvable:$true] %s38
      %41 = dma.hbm_to_vmem [thread:$0]  %s4, 256, %s39, [#allocation6]
    $region21: #{tpu_custom_call.1} parent=1 // pred_fallthru
      _
    // Predicated region
    $region22: #{tpu_custom_call.1} parent=1 // pred_check
      _
    $region23: #{tpu_custom_call.1} parent=1 // pred_check_branch
      %43 = sbr.rel (0) target = $region25
    $region24: #{tpu_custom_call.1} parent=1 // pred_region
      %44 = dma.done [#allocation3], 256
    $region25: #{tpu_custom_call.1} parent=1 // pred_fallthru
      _
    // Predicated region
    $region26: #{tpu_custom_call.1} parent=1 // pred_check
      _
    $region27: #{tpu_custom_call.1} parent=1 // pred_check_branch
      %46 = sbr.rel (0) target = $region29
    $region28: #{tpu_custom_call.1} parent=1 // pred_region
      %47 = dma.done [#allocation6], 256
    $region29: #{tpu_custom_call.1} parent=1 // pred_fallthru
      _
    %v48 = vld [vmem:[%s0] sm:$0xff]
    %v49 = vld [vmem:[%s1] sm:$0xff]
    %v50 = vld [vmem:[%s2] sm:$0xff]
    %v51 = vld [vmem:[%s2 + $0x8] sm:$0xff]
    %v52 = vld [vmem:[#allocation2] sm:$0xff]
    %v53 = vld [vmem:[#allocation2 + $0x8] sm:$0xff]
    %v54 = vld [vmem:[#allocation5] sm:$0xff]
    %v55 = vld [vmem:[#allocation5 + $0x8] sm:$0xff]
    %v56 = vsub.f32 1.0, %v48
    %58 = vset.pattern.permute.xlu0 0
    %59 = vperm.xlu0 %58, %v56
    %v60 = vpop.permute.xlu0 %59
    %v62 = vmul.f32 %v60, %v50
    %v63 = vmul.f32 %v60, %v51
    %65 = vset.pattern.permute.xlu0 0
    %66 = vperm.xlu0 %65, %v48
    %v67 = vpop.permute.xlu0 %66
    %v69 = vmul.f32 %v67, %v52
    %v70 = vmul.f32 %v67, %v53
    %v71 = vadd.f32 %v62, %v69
    %v72 = vadd.f32 %v63, %v70
    %74 = vset.pattern.permute.xlu0 0
    %75 = vperm.xlu0 %74, %v49
    %v76 = vpop.permute.xlu0 %75
    %v78 = vmul.f32 %v76, %v54
    %v79 = vmul.f32 %v76, %v55
    %v80 = vadd.f32 %v71, %v78
    %v81 = vadd.f32 %v72, %v79
    %82 = vst [vmem:[#allocation7] sm:$0xff] %v80
    %83 = vst [vmem:[#allocation7 + $0x8] sm:$0xff] %v81
    %v84 = vsub.f32 %v71, %v78
    %v85 = vsub.f32 %v72, %v79
    %86 = vst [vmem:[#allocation8] sm:$0xff] %v84
    %87 = vst [vmem:[#allocation8 + $0x8] sm:$0xff] %v85
    // Predicated region
    $region30: #{tpu_custom_call.1} parent=1 // pred_check
      _
    $region31: #{tpu_custom_call.1} parent=1 // pred_check_branch
      %89 = sbr.rel (0) target = $region33
    $region32: #{tpu_custom_call.1} parent=1 // pred_region
      %s91 = ssub.s32 256, 256
      %92 = vsyncadd [#allocation4], %s91
      %s94 = sshll.u32 [#allocation7], 4
      %s95 = int_to_ptr.vmem [resolvable:$true] %s94
      %97 = dma.vmem_to_hbm [thread:$0]  %s95, 256, %s5, [#allocation4]
    $region33: #{tpu_custom_call.1} parent=1 // pred_fallthru
      _
    // Predicated region
    $region34: #{tpu_custom_call.1} parent=1 // pred_check
      _
    $region35: #{tpu_custom_call.1} parent=1 // pred_check_branch
      %99 = sbr.rel (0) target = $region37
    $region36: #{tpu_custom_call.1} parent=1 // pred_region
      %s101 = ssub.s32 256, 256
      %102 = vsyncadd [#allocation9], %s101
      %s104 = sshll.u32 [#allocation8], 4
      %s105 = int_to_ptr.vmem [resolvable:$true] %s104
      %107 = dma.vmem_to_hbm [thread:$0]  %s105, 256, %s6, [#allocation9]
    $region37: #{tpu_custom_call.1} parent=1 // pred_fallthru
      _
    // Predicated region
    $region38: #{tpu_custom_call.1} parent=1 // pred_check
      _
    $region39: #{tpu_custom_call.1} parent=1 // pred_check_branch
      %109 = sbr.rel (0) target = $region41
    $region40: #{tpu_custom_call.1} parent=1 // pred_region
      %110 = dma.done [#allocation4], 256
    $region41: #{tpu_custom_call.1} parent=1 // pred_fallthru
      _
    // Predicated region
    $region42: #{tpu_custom_call.1} parent=1 // pred_check
      _
    $region43: #{tpu_custom_call.1} parent=1 // pred_check_branch
      %112 = sbr.rel (0) target = $region45
    $region44: #{tpu_custom_call.1} parent=1 // pred_region
      %113 = dma.done [#allocation9], 256
    $region45: #{tpu_custom_call.1} parent=1 // pred_fallthru
      _
    %114 = vsyncpa [#allocation3], 1
    %115 = vsyncpa [#allocation6], 1
    %116 = vsyncpa [#allocation4], 1
    %117 = vsyncpa [#allocation9], 1

</llo_original>
